<compile_context>
chip_gen: v7x
topology: tpu7x:2x2x1
jax: 0.10.0
libtpu: 0.0.40
codegen_flags: <defaults>
</compile_context>

<pallas_src>
import functools

import jax
import jax.numpy as jnp
from jax import lax
from jax.experimental import pallas as pl
from jax.experimental.pallas import tpu as pltpu


# ----------------------------------------------------------------------------
# Helpers: VMEM budget + HW tile sizing
# ----------------------------------------------------------------------------
def _round_up(x, m):
    return ((x + m - 1) // m) * m


def _vmem_limit_bytes():
    """Scoped VMEM limit: 1/2 of physical VMEM, capped at 64 MiB (v7x-safe)."""
    try:
        cap = int(pltpu.get_tpu_info().vmem_capacity_bytes)
    except Exception:
        cap = 64 * 1024 * 1024  # conservative (v7x) fallback
    return int(min(cap // 2, 64 * 1024 * 1024))


def _choose_hw_tile(hw, c, npad, x_itemsize, cdt_itemsize, vmem_limit, use_xxt, x_buffers):
    """Largest multiple-of-128 HW tile (capped at 2048) that fits the VMEM budget."""
    acc_dim = c if use_xxt else npad
    # Resident bytes (per batch): proj block (double-buffered, compute dtype),
    # target / gram / output blocks (f32, double-buffered), accumulator scratch,
    # finalize temporaries (P@S, G, diff).
    fixed = (2 * npad * c * cdt_itemsize
             + 4 * npad * npad * 4
             + acc_dim * acc_dim * 4
             + 4 * npad * npad * 4)
    # Per HW column bytes (inner-loop residents + temporaries).
    if use_xxt:
        per_col = (x_buffers * c * x_itemsize     # X tile, multi-buffered
                   + 2 * c * cdt_itemsize         # compute-dtype X + its transpose
                   + c * 4)                       # layout-copy slack
    else:
        per_col = (x_buffers * c * x_itemsize     # X tile, multi-buffered
                   + c * cdt_itemsize             # compute-dtype X
                   + npad * 4                     # Y (f32)
                   + 2 * npad * cdt_itemsize      # Y (compute dtype) + its transpose
                   + npad * 4)                    # slack
    slack = 2 << 20
    budget = vmem_limit - fixed - slack
    if budget < 128 * per_col:
        raise ValueError(
            "VMEM budget too small for this problem: need at least "
            f"{fixed + slack + 128 * per_col} bytes, limit is {vmem_limit}. "
            "Reduce n_proj / channels or raise the VMEM limit.")
    # HBM-roofline gains saturate around 512-1024 columns; cap keeps >=several grid
    # steps for pipelining and shrinks the Y/Y^T temporaries.
    t_max = min(budget // per_col, 2048)
    t_max = (int(t_max) // 128) * 128
    return int(min(t_max, _round_up(hw, 128)))


# ----------------------------------------------------------------------------
# Kernel bodies (shared by gram-matrix and loss kernels)
# ----------------------------------------------------------------------------
def _accumulate_tile(proj_ref, x_ref, acc_ref, *, hw, t_hw, mask_tail, use_xxt,
                     compute_dtype):
    t = pl.program_id(1)
    x = x_ref[0].astype(compute_dtype)                    # (C, T_HW): in-kernel cast
    if mask_tail:                                         # static: hw % t_hw != 0
        col = lax.broadcasted_iota(jnp.int32, x.shape, 1)
        x = jnp.where(t * t_hw + col < hw, x, jnp.zeros_like(x))
    if use_xxt:
        # acc += X_t X_t^T  (C, C); the projection is applied once at finalize.
        acc_ref[...] += lax.dot_general(
            x, x, dimension_numbers=(((1,), (1,)), ((), ())),
            preferred_element_type=jnp.float32)
    else:
        p = proj_ref[0]                                   # (npad, C), compute dtype
        y = jnp.dot(p, x, preferred_element_type=jnp.float32)       # (npad, T_HW)
        yb = y.astype(compute_dtype)                      # halves Y^T traffic / MXU passes
        acc_ref[...] += lax.dot_general(
            yb, yb, dimension_numbers=(((1,), (1,)), ((), ())),
            preferred_element_type=jnp.float32)


def _finalize_gram(proj_ref, acc_ref, *, scale, use_xxt, compute_dtype):
    if use_xxt:
        p = proj_ref[0]                                               # (npad, C)
        s = acc_ref[...].astype(compute_dtype)                        # (C, C)
        ps = jnp.dot(p, s, preferred_element_type=jnp.float32)        # (npad, C)
        g = lax.dot_general(ps.astype(compute_dtype), p,              # P S P^T
                            dimension_numbers=(((1,), (1,)), ((), ())),
                            preferred_element_type=jnp.float32)
    else:
        g = acc_ref[...]
    return g * scale


def _gram_kernel(proj_ref, x_ref, g_ref, acc_ref, *, scale, hw, t_hw, mask_tail,
                 use_xxt, compute_dtype):
    t = pl.program_id(1)

    @pl.when(t == 0)
    def _():
        acc_ref[...] = jnp.zeros_like(acc_ref)

    _accumulate_tile(proj_ref, x_ref, acc_ref, hw=hw, t_hw=t_hw, mask_tail=mask_tail,
                     use_xxt=use_xxt, compute_dtype=compute_dtype)

    @pl.when(t == pl.num_programs(1) - 1)
    def _():
        g = _finalize_gram(proj_ref, acc_ref, scale=scale, use_xxt=use_xxt,
                           compute_dtype=compute_dtype)
        g_ref[0] = g.astype(g_ref.dtype)


def _loss_kernel(proj_ref, x_ref, tgt_ref, sse_ref, acc_ref, *, scale, hw, t_hw,
                 mask_tail, use_xxt, compute_dtype):
    t = pl.program_id(1)

    @pl.when(t == 0)
    def _():
        acc_ref[...] = jnp.zeros_like(acc_ref)

    _accumulate_tile(proj_ref, x_ref, acc_ref, hw=hw, t_hw=t_hw, mask_tail=mask_tail,
                     use_xxt=use_xxt, compute_dtype=compute_dtype)

    @pl.when(t == pl.num_programs(1) - 1)
    def _():
        g = _finalize_gram(proj_ref, acc_ref, scale=scale, use_xxt=use_xxt,
                           compute_dtype=compute_dtype)
        diff = g - tgt_ref[0]                              # (npad, npad), f32
        sse = jnp.sum(diff * diff)                         # once per batch, not per tile
        # Lane-dense store of the per-batch partial SSE (same scalar in all 128 lanes).
        sse_ref[...] = jnp.full(sse_ref.shape, sse, dtype=sse_ref.dtype)


# ----------------------------------------------------------------------------
# Wrappers
# ----------------------------------------------------------------------------
def _tiling(proj_pad, x_flat, compute_dtype, hw_tile, use_xxt, x_buffers):
    b, npad, c = proj_pad.shape
    hw = int(x_flat.shape[-1])
    if use_xxt is None:
        use_xxt = npad >= c
    vmem_limit = _vmem_limit_bytes()
    if hw_tile is None:
        t_hw = _choose_hw_tile(hw, c, npad, jnp.dtype(x_flat.dtype).itemsize,
                               jnp.dtype(compute_dtype).itemsize, vmem_limit,
                               use_xxt, x_buffers)
    else:
        t_hw = int(hw_tile)
    num_t = pl.cdiv(hw, t_hw)
    mask_tail = (hw % t_hw) != 0
    return b, npad, c, hw, t_hw, num_t, mask_tail, use_xxt, vmem_limit


def _x_spec(c, t_hw, x_buffers):
    if x_buffers == 2:
        return pl.BlockSpec((1, c, t_hw), lambda i, t: (i, 0, t))
    return pl.BlockSpec((1, c, t_hw), lambda i, t: (i, 0, t),
                        pipeline_mode=pl.Buffered(x_buffers))


def gram_matrix(proj_pad, x_flat, *, n_proj, compute_dtype=jnp.bfloat16,
                hw_tile=None, use_xxt=None, x_buffers=2):
    """proj_pad: (B, npad, C), x_flat: (B, C, HW) -> (B, npad, npad) f32 projected Gram."""
    b, npad, c, hw, t_hw, num_t, mask_tail, use_xxt, vmem_limit = _tiling(
        proj_pad, x_flat, compute_dtype, hw_tile, use_xxt, x_buffers)
    proj_pad = proj_pad.astype(compute_dtype)              # tiny; X stays in native dtype
    scale = 1.0 / float(hw * n_proj)
    acc_dim = c if use_xxt else npad

    kernel = functools.partial(_gram_kernel, scale=scale, hw=hw, t_hw=t_hw,
                               mask_tail=mask_tail, use_xxt=use_xxt,
                               compute_dtype=compute_dtype)
    return pl.pallas_call(
        kernel,
        out_shape=jax.ShapeDtypeStruct((b, npad, npad), jnp.float32),
        grid_spec=pltpu.PrefetchScalarGridSpec(
            num_scalar_prefetch=0,
            grid=(b, num_t),
            in_specs=[
                pl.BlockSpec((1, npad, c), lambda i, t: (i, 0, 0)),
                _x_spec(c, t_hw, x_buffers),
            ],
            out_specs=pl.BlockSpec((1, npad, npad), lambda i, t: (i, 0, 0)),
            scratch_shapes=[pltpu.VMEM((acc_dim, acc_dim), jnp.float32)],
        ),
        compiler_params=pltpu.CompilerParams(
            dimension_semantics=("parallel", "arbitrary"),
            vmem_limit_bytes=vmem_limit,
        ),
    )(proj_pad, x_flat)


def gram_loss(proj_pad, x_flat, target, *, n_proj, compute_dtype=jnp.bfloat16,
              hw_tile=None, use_xxt=None, x_buffers=2):
    """Scalar MSE between gram(x) and target. target: (B, npad, npad) f32."""
    b, npad, c, hw, t_hw, num_t, mask_tail, use_xxt, vmem_limit = _tiling(
        proj_pad, x_flat, compute_dtype, hw_tile, use_xxt, x_buffers)
    proj_pad = proj_pad.astype(compute_dtype)
    target = target.astype(jnp.float32)
    scale = 1.0 / float(hw * n_proj)
    acc_dim = c if use_xxt else npad

    kernel = functools.partial(_loss_kernel, scale=scale, hw=hw, t_hw=t_hw,
                               mask_tail=mask_tail, use_xxt=use_xxt,
                               compute_dtype=compute_dtype)
    sse_rows = pl.pallas_call(
        kernel,
        out_shape=jax.ShapeDtypeStruct((b, 1, 128), jnp.float32),
        grid_spec=pltpu.PrefetchScalarGridSpec(
            num_scalar_prefetch=0,
            grid=(b, num_t),
            in_specs=[
                pl.BlockSpec((1, npad, c), lambda i, t: (i, 0, 0)),
                _x_spec(c, t_hw, x_buffers),
                pl.BlockSpec((1, npad, npad), lambda i, t: (i, 0, 0)),
            ],
            out_specs=pl.BlockSpec((1, 1, 128), lambda i, t: (i, 0, 0)),
            scratch_shapes=[pltpu.VMEM((acc_dim, acc_dim), jnp.float32)],
        ),
        compiler_params=pltpu.CompilerParams(
            dimension_semantics=("parallel", "arbitrary"),
            vmem_limit_bytes=vmem_limit,
        ),
    )(proj_pad, x_flat, target)
    # Padded rows/cols of both grams are exactly 0, so they add 0 to the SSE;
    # divide by the real element count B * n_proj^2.
    return jnp.sum(sse_rows[:, 0, 0]) / jnp.float32(b * n_proj * n_proj)


# ----------------------------------------------------------------------------
# Module-equivalent wrapper
# ----------------------------------------------------------------------------
class GramMatrixLossRandomProjection:
    def __init__(self, target_feature, n_proj, key, compute_dtype=jnp.bfloat16):
        b, c, h, w = target_feature.shape
        self.n_proj = max(1, int(n_proj * c))
        # torch.randn(b, n_proj, c) normalized by L2 norm over dim=1 (n_proj axis).
        # TODO(synk): torch.norm has no eps clamp here either, but F.normalize-style
        #             eps is omitted; zero norm is astronomically unlikely for Gaussians.
        proj = jax.random.normal(key, (b, self.n_proj, c), dtype=jnp.float32)
        norm = jnp.sqrt(jnp.sum(proj * proj, axis=1, keepdims=True))
        self.proj = proj / norm                   # exposed f32, matches PyTorch semantics
        self.compute_dtype = compute_dtype        # bf16 default: native MXU on v5e/v6e/v7x

        # Pad n_proj to a multiple of 16 (bf16 sublane packing; harmless for f32).
        # Zero rows -> zero rows/cols in both grams, so the loss is unchanged.
        self.n_proj_pad = max(16, _round_up(self.n_proj, 16))
        pad = self.n_proj_pad - self.n_proj
        proj_pad = jnp.pad(self.proj, ((0, 0), (0, pad), (0, 0))) if pad else self.proj
        self._proj_k = proj_pad.astype(compute_dtype)

        # target gram kept in f32; scale (1/(H*W*n_proj)) is applied in-kernel at
        # finalize so inputs with a different H*W than the target still match PyTorch.
        tgt_flat = target_feature.reshape(b, c, h * w)
        self.target = gram_matrix(self._proj_k, tgt_flat, n_proj=self.n_proj,
                                  compute_dtype=compute_dtype)

    def __call__(self, x):
        b, c, h, w = x.shape
        x_flat = x.reshape(b, c, h * w)           # no dtype cast here: kernel casts per tile
        return gram_loss(self._proj_k, x_flat, self.target, n_proj=self.n_proj,
                         compute_dtype=self.compute_dtype)


# ----------------------------------------------------------------------------
# Pure-JAX reference (for correctness checks)
# ----------------------------------------------------------------------------
def _ref_gram(proj, x_flat, n_proj, hw):
    hi = lax.Precision.HIGHEST
    y = jnp.einsum("bpc,bcs->bps", proj, x_flat, precision=hi)
    return jnp.einsum("bps,bqs->bpq", y, y, precision=hi) / (hw * n_proj)


if __name__ == "__main__":
    key = jax.random.PRNGKey(0)
    k_tgt, k_in, k_proj, k_t2, k_x2 = jax.random.split(key, 5)

    B, C, H, W = 2, 4, 16, 16
    n_proj_frac = 2.0                       # -> n_proj = int(2.0 * 4) = 8
    hw = H * W

    target_feature = jax.random.normal(k_tgt, (B, C, H, W), dtype=jnp.float32)
    x = jax.random.normal(k_in, (B, C, H, W), dtype=jnp.float32)

    # --- bf16 (default) module: end-to-end loss, loose tolerance (bf16 compute) ---
    mod = GramMatrixLossRandomProjection(target_feature, n_proj_frac, k_proj)
    loss_bf16 = jax.block_until_ready(mod(x))

    tgt_ref = _ref_gram(mod.proj, target_feature.reshape(B, C, hw), mod.n_proj, hw)
    g_ref = _ref_gram(mod.proj, x.reshape(B, C, hw), mod.n_proj, hw)
    loss_ref = jnp.mean((g_ref - tgt_ref) ** 2)
    assert jnp.allclose(loss_bf16, loss_ref, rtol=3e-1, atol=1e-6), (loss_bf16, loss_ref)

    # --- f32-compute module: tighter end-to-end check ---
    mod32 = GramMatrixLossRandomProjection(target_feature, n_proj_frac, k_proj,
                                           compute_dtype=jnp.float32)
    loss_f32 = jax.block_until_ready(mod32(x))
    assert jnp.allclose(loss_f32, loss_ref, rtol=1.5e-1, atol=1e-6), (loss_f32, loss_ref)

    # --- gram kernel checks: both reduction structures, real rows vs reference,
    #     padded rows exactly zero, multi-tile vs single-tile consistency ---
    npj = mod32.n_proj
    x_flat = x.reshape(B, C, hw)
    g_xxt = gram_matrix(mod32._proj_k, x_flat, n_proj=npj, compute_dtype=jnp.float32)
    g_px = gram_matrix(mod32._proj_k, x_flat, n_proj=npj, compute_dtype=jnp.float32,
                       use_xxt=False)
    g_two = gram_matrix(mod32._proj_k, x_flat, n_proj=npj, compute_dtype=jnp.float32,
                        hw_tile=128)                      # explicit 2-tile reduction path
    assert jnp.allclose(g_xxt[:, :npj, :npj], g_ref, rtol=1e-2, atol=5e-4)
    assert jnp.allclose(g_px[:, :npj, :npj], g_ref, rtol=1e-2, atol=5e-4)
    assert jnp.allclose(g_two, g_xxt, rtol=1e-2, atol=5e-4)
    assert bool(jnp.all(g_xxt[:, npj:, :] == 0.0)) and bool(jnp.all(g_xxt[:, :, npj:] == 0.0))

    # --- masked-tail path: HW = 15*15 = 225 is not a multiple of 128 ---
    H2 = W2 = 15
    hw2 = H2 * W2
    tf2 = jax.random.normal(k_t2, (B, C, H2, W2), dtype=jnp.float32)
    x2 = jax.random.normal(k_x2, (B, C, H2, W2), dtype=jnp.float32)
    mod2 = GramMatrixLossRandomProjection(tf2, n_proj_frac, k_proj,
                                          compute_dtype=jnp.float32)
    loss2 = jax.block_until_ready(mod2(x2))
    tgt2_ref = _ref_gram(mod2.proj, tf2.reshape(B, C, hw2), mod2.n_proj, hw2)
    g2_ref = _ref_gram(mod2.proj, x2.reshape(B, C, hw2), mod2.n_proj, hw2)
    loss2_ref = jnp.mean((g2_ref - tgt2_ref) ** 2)
    assert jnp.allclose(loss2, loss2_ref, rtol=1.5e-1, atol=1e-6), (loss2, loss2_ref)

    # Single 256-wide block (225 valid) vs two 128-wide blocks (2nd partially OOB &
    # masked) must agree — validates the tail-masking logic directly.
    x2_flat = x2.reshape(B, C, hw2)
    g2_one = gram_matrix(mod2._proj_k, x2_flat, n_proj=mod2.n_proj,
                         compute_dtype=jnp.float32)
    g2_two = gram_matrix(mod2._proj_k, x2_flat, n_proj=mod2.n_proj,
                         compute_dtype=jnp.float32, hw_tile=128)
    assert jnp.allclose(g2_one, g2_two, rtol=1e-2, atol=5e-4)

    loss2_tiled = gram_loss(mod2._proj_k, x2_flat, mod2.target, n_proj=mod2.n_proj,
                            compute_dtype=jnp.float32, hw_tile=128)
    loss2_tiled = jax.block_until_ready(loss2_tiled)
    assert jnp.allclose(loss2_tiled, loss2_ref, rtol=1.5e-1, atol=1e-6), (loss2_tiled, loss2_ref)

    print("KERNEL_OK")
</pallas_src>

<mosaic_0001>
module attributes {stable_mosaic.version = 11 : i64} {
  func.func @_gram_kernel(%arg0: i32, %arg1: i32, %arg2: memref<1x16x4xbf16, #tpu.memory_space<vmem>>, %arg3: memref<1x4x256xf32, #tpu.memory_space<vmem>>, %arg4: memref<1x16x16xf32, #tpu.memory_space<vmem>>, %arg5: memref<4x4xf32, #tpu.memory_space<vmem>>) attributes {dimension_semantics = [#tpu.dimension_semantics<parallel>, #tpu.dimension_semantics<arbitrary>], iteration_bounds = array<i64: 2, 1>, scalar_prefetch = 0 : i64, scratch_operands = 1 : i64, tpu.core_type = #tpu.core_type<tc>, window_params = [{transform_indices = @transform_0, window_bounds = array<i64: 1, 16, 4>}, {transform_indices = @transform_1, window_bounds = array<i64: 1, 4, 256>}, {transform_indices = @transform_2, window_bounds = array<i64: 1, 16, 16>}]} {
    %c0_i32 = arith.constant 0 : i32
    %0 = arith.cmpi eq, %arg1, %c0_i32 : i32
    %1 = arith.extui %0 : i1 to i32
    %c0_i32_0 = arith.constant 0 : i32
    %2 = arith.cmpi ne, %1, %c0_i32_0 : i32
    scf.if %2 {
      %cst_9 = arith.constant 0.000000e+00 : f32
      %13 = vector.broadcast %cst_9 : f32 to vector<4x4xf32>
      %c0_10 = arith.constant 0 : index
      %c0_11 = arith.constant 0 : index
      %14 = vector.load %arg5[%c0_10, %c0_11] : memref<4x4xf32, #tpu.memory_space<vmem>>, vector<4x4xf32>
      tpu.vector_store %arg5[%c0_10, %c0_11], %13 {strides = array<i32>} : memref<4x4xf32, #tpu.memory_space<vmem>>, vector<4x4xf32>,
    } else {
    }
    %c0 = arith.constant 0 : index
    %c0_1 = arith.constant 0 : index
    %c0_2 = arith.constant 0 : index
    %3 = vector.load %arg3[%c0, %c0_1, %c0_2] : memref<1x4x256xf32, #tpu.memory_space<vmem>>, vector<1x4x256xf32>
    %4 = vector.shape_cast %3 : vector<1x4x256xf32> to vector<4x256xf32>
    %5 = arith.truncf %4 : vector<4x256xf32> to vector<4x256xbf16>
    %c0_3 = arith.constant 0 : index
    %c0_4 = arith.constant 0 : index
    %6 = vector.load %arg5[%c0_3, %c0_4] : memref<4x4xf32, #tpu.memory_space<vmem>>, vector<4x4xf32>
    %cst = arith.constant dense<0.000000e+00> : vector<4x4xf32>
    %7 = tpu.matmul %5, %5, %cst {dimension_numbers = #tpu.dot_dimension_numbers<[1], [1], [0], [0], [0, 0, 1, 0], [], []>} : vector<4x256xbf16>, vector<4x256xbf16>, vector<4x4xf32> -> vector<4x4xf32>
    %8 = arith.addf %6, %7 : vector<4x4xf32>
    %c0_5 = arith.constant 0 : index
    %c0_6 = arith.constant 0 : index
    %9 = vector.load %arg5[%c0_5, %c0_6] : memref<4x4xf32, #tpu.memory_space<vmem>>, vector<4x4xf32>
    tpu.vector_store %arg5[%c0_5, %c0_6], %8 {strides = array<i32>} : memref<4x4xf32, #tpu.memory_space<vmem>>, vector<4x4xf32>,
    %c0_i32_7 = arith.constant 0 : i32
    %10 = arith.cmpi eq, %arg1, %c0_i32_7 : i32
    %11 = arith.extui %10 : i1 to i32
    %c0_i32_8 = arith.constant 0 : i32
    %12 = arith.cmpi ne, %11, %c0_i32_8 : i32
    scf.if %12 {
      %c0_9 = arith.constant 0 : index
      %c0_10 = arith.constant 0 : index
      %c0_11 = arith.constant 0 : index
      %13 = vector.load %arg2[%c0_9, %c0_10, %c0_11] : memref<1x16x4xbf16, #tpu.memory_space<vmem>>, vector<1x16x4xbf16>
      %14 = vector.shape_cast %13 : vector<1x16x4xbf16> to vector<16x4xbf16>
      %c0_12 = arith.constant 0 : index
      %c0_13 = arith.constant 0 : index
      %15 = vector.load %arg5[%c0_12, %c0_13] : memref<4x4xf32, #tpu.memory_space<vmem>>, vector<4x4xf32>
      %16 = arith.truncf %15 : vector<4x4xf32> to vector<4x4xbf16>
      %cst_14 = arith.constant dense<0.000000e+00> : vector<16x4xf32>
      %17 = tpu.matmul %14, %16, %cst_14 {dimension_numbers = #tpu.dot_dimension_numbers<[1], [0], [0], [1], [0, 0, 1, 1], [], []>} : vector<16x4xbf16>, vector<4x4xbf16>, vector<16x4xf32> -> vector<16x4xf32>
      %18 = arith.truncf %17 : vector<16x4xf32> to vector<16x4xbf16>
      %cst_15 = arith.constant dense<0.000000e+00> : vector<16x16xf32>
      %19 = tpu.matmul %18, %14, %cst_15 {dimension_numbers = #tpu.dot_dimension_numbers<[1], [1], [0], [0], [0, 0, 1, 0], [], []>} : vector<16x4xbf16>, vector<16x4xbf16>, vector<16x16xf32> -> vector<16x16xf32>
      %cst_16 = arith.constant 4.8828125E-4 : f32
      %20 = vector.broadcast %cst_16 : f32 to vector<16x16xf32>
      %21 = arith.mulf %19, %20 : vector<16x16xf32>
      %c0_17 = arith.constant 0 : index
      %c0_18 = arith.constant 0 : index
      %c0_19 = arith.constant 0 : index
      %22 = vector.load %arg4[%c0_17, %c0_18, %c0_19] : memref<1x16x16xf32, #tpu.memory_space<vmem>>, vector<1x16x16xf32>
      %23 = vector.shape_cast %22 : vector<1x16x16xf32> to vector<16x16xf32>
      %24 = vector.shape_cast %21 : vector<16x16xf32> to vector<1x16x16xf32>
      tpu.vector_store %arg4[%c0_17, %c0_18, %c0_19], %24 {strides = array<i32>} : memref<1x16x16xf32, #tpu.memory_space<vmem>>, vector<1x16x16xf32>,
    } else {
    }
    return
  }
  func.func @transform_0(%arg0: i32, %arg1: i32) -> (i32, i32, i32) {
    %c0_i32 = arith.constant 0 : i32
    %c0_i32_0 = arith.constant 0 : i32
    %c0_i32_1 = arith.constant 0 : i32
    return %arg0, %c0_i32, %c0_i32_0 : i32, i32, i32
  }
  func.func @transform_1(%arg0: i32, %arg1: i32) -> (i32, i32, i32) {
    %c0_i32 = arith.constant 0 : i32
    %c0_i32_0 = arith.constant 0 : i32
    return %arg0, %c0_i32, %arg1 : i32, i32, i32
  }
  func.func @transform_2(%arg0: i32, %arg1: i32) -> (i32, i32, i32) {
    %c0_i32 = arith.constant 0 : i32
    %c0_i32_0 = arith.constant 0 : i32
    %c0_i32_1 = arith.constant 0 : i32
    return %arg0, %c0_i32, %c0_i32_0 : i32, i32, i32
  }
}

</mosaic_0001>

<llo_original>
// kernel: tpu_custom_call.1
$region0: #{tpu_custom_call.1}
  #allocation0 [shape = 'u32[]', space=smem, size = 0x4, offset = 0x4, fixed_abs, tag = 'smem constant byte address 0x4 - core index']
  #allocation1 [shape = 'u32[144,128]{1,0:T(1,128)}', space=vmem, size = 0x12000, scoped, tag = 'internal scratch']
  #allocation2 [shape = 'f32[4,4]{1,0:T(4,128)}', space=vmem, size = 0x800, scoped, tag = 'scratch operand']
  %s0 = inlined_call_operand.vmem [shape: bf16[2,16,4], index: 0, kind: input, shape index: {}]
  %s1 = inlined_call_operand.vmem [shape: f32[2,4,256], index: 1, kind: input, shape index: {}]
  %s2 = inlined_call_operand.hbm [shape: f32[2,16,16], index: 2, kind: output, shape index: {}]
  %s3 = sld [smem:[#allocation0]]
  $region49: #{tpu_custom_call.1} parent=0
    _
  %s5 = ssub.s32 1, %s3
  %s6 = scalar_select 0, %s5, %s3
  $region1: #{tpu_custom_call.1} parent=0
    #allocation3 [shape = 'u8[16384]{0}', space=vmem, size = 0x4000, scoped, tag = 'output window, operand 0']
    #allocation4 [shape = 's32[2]{0}', space=sflag, size = 0x8, scoped, tag = 'scoped memory for tpu_custom_call.1']
    %7 = vsyncpa [#allocation4], 0
    %s8 = scalar_lea.sflag [#allocation4], 1
    %9 = vsyncpa %s8, 0
    loop: start=0, step=1, limit=4
    $region2: #{tpu_custom_call.1} parent=1 // loop_pre_header
      _
    $region3: #{tpu_custom_call.1} parent=1 // loop_header
      %s11 = sphi 0, %s15
      %p12 = scmp.ge.s32.totalorder %s11, 4
      %s18 = sphi 0, %s30
      %s19 = sphi 0, %s26
      %s20 = sphi 0, %s18
      %s21 = sphi 0, %s19
      %s22 = sphi 0, %s20
      %s23 = sphi 0, %s21
      %s33 = sphi 0, %s35
      %s36 = sphi 0, %s33
      %s37 = sphi 0, %s36
      %s53 = sphi 0, %s37
      %s61 = sphi 0, %s63
      %s64 = sphi 0, %s61
      %s65 = sphi 0, %s64
      %s81 = sphi 0, %s65
      %s87 = sphi 0, %s89
      %s90 = sphi 0, %s87
      %s91 = sphi 0, %s90
      %s107 = sphi 0, %s91
    $region4: #{tpu_custom_call.1} parent=1 // loop_header_branch
      %14 = sbr.rel (%p12) target = $region8
    $region5: #{tpu_custom_call.1} parent=1 // loop_body
      %s16 = ssub.s32 %s11, 1
      %s17 = ssub.s32 %s11, 2
      %s24 = sadd.s32 1, %s19
      %p25 = scmp.ge.s32.totalorder %s24, 1
      %s26 = scalar_select %p25, 0, %s24
      %s27 = sadd.s32 1, %s18
      %s28 = scalar_select %p25, %s27, %s18
      %p29 = scmp.ge.s32.totalorder %s28, 2
      %s30 = scalar_select %p29, 0, %s28
      %s31 = ssub.s32 %s18, %s30
      %p32 = scmp.eq.s32.totalorder %s31, 0
      %s34 = sadd.s32 %s33, 1
      %s35 = scalar_select %p32, %s33, %s34
      %p38 = pneg %p32
      %p39 = scmp.eq.s32.totalorder %s11, 1
      %p40 = por %p38, %p39
      %p41 = scmp.ne.s32.totalorder %s33, %s36
      %p42 = scmp.eq.s32.totalorder %s11, 0
      %p43 = por %p41, %p42
      %p44 = scmp.ne.s32.totalorder %s33, %s36
      %p45 = scmp.eq.s32.totalorder %s16, 1
      %p46 = por %p44, %p45
      %p47 = scmp.ne.s32.totalorder %s36, %s37
      %p48 = scmp.eq.s32.totalorder %s16, 0
      %p49 = por %p47, %p48
      %p50 = scmp.ne.s32.totalorder %s36, %s37
      %p51 = scmp.eq.s32.totalorder %s17, 1
      %p52 = por %p50, %p51
      %p54 = scmp.ne.s32.totalorder %s37, %s53
      %p55 = scmp.eq.s32.totalorder %s17, 0
      %p56 = por %p54, %p55
      %s57 = ssub.s32 %s18, %s30
      %s58 = ssub.s32 %s19, %s26
      %s59 = sor.u32 %s57, %s58
      %p60 = scmp.eq.s32.totalorder %s59, 0
      %s62 = sadd.s32 %s61, 1
      %s63 = scalar_select %p60, %s61, %s62
      %p66 = pneg %p60
      %p67 = scmp.eq.s32.totalorder %s11, 1
      %p68 = por %p66, %p67
      %p69 = scmp.ne.s32.totalorder %s61, %s64
      %p70 = scmp.eq.s32.totalorder %s11, 0
      %p71 = por %p69, %p70
      %p72 = scmp.ne.s32.totalorder %s61, %s64
      %p73 = scmp.eq.s32.totalorder %s16, 1
      %p74 = por %p72, %p73
      %p75 = scmp.ne.s32.totalorder %s64, %s65
      %p76 = scmp.eq.s32.totalorder %s16, 0
      %p77 = por %p75, %p76
      %p78 = scmp.ne.s32.totalorder %s64, %s65
      %p79 = scmp.eq.s32.totalorder %s17, 1
      %p80 = por %p78, %p79
      %p82 = scmp.ne.s32.totalorder %s65, %s81
      %p83 = scmp.eq.s32.totalorder %s17, 0
      %p84 = por %p82, %p83
      %s85 = ssub.s32 %s18, %s30
      %p86 = scmp.eq.s32.totalorder %s85, 0
      %s88 = sadd.s32 %s87, 1
      %s89 = scalar_select %p86, %s87, %s88
      %p92 = pneg %p86
      %p93 = scmp.eq.s32.totalorder %s11, 1
      %p94 = por %p92, %p93
      %p95 = scmp.ne.s32.totalorder %s87, %s90
      %p96 = scmp.eq.s32.totalorder %s11, 0
      %p97 = por %p95, %p96
      %p98 = scmp.ne.s32.totalorder %s87, %s90
      %p99 = scmp.eq.s32.totalorder %s16, 1
      %p100 = por %p98, %p99
      %p101 = scmp.ne.s32.totalorder %s90, %s91
      %p102 = scmp.eq.s32.totalorder %s16, 0
      %p103 = por %p101, %p102
      %p104 = scmp.ne.s32.totalorder %s90, %s91
      %p105 = scmp.eq.s32.totalorder %s17, 1
      %p106 = por %p104, %p105
      %p108 = scmp.ne.s32.totalorder %s91, %s107
      %p109 = scmp.eq.s32.totalorder %s17, 0
      %p110 = por %p108, %p109
      %p111 = scmp.le.s32.totalorder 1, %s11
      %p112 = scmp.lt.s32.totalorder %s11, 3
      %p113 = pnand %p111, %p112
      %p114 = pneg %p113
      // Predicated region
      $region9: #{tpu_custom_call.1} parent=5 // pred_check
        _
      $region10: #{tpu_custom_call.1} parent=5 // pred_check_branch
        %116 = sbr.rel (%p113) target = $region12
      $region11: #{tpu_custom_call.1} parent=5 // pred_region
        %s117 = ssub.s32 %s11, 1
      $region12: #{tpu_custom_call.1} parent=5 // pred_fallthru
        _
      %p118 = scmp.lt.s32.totalorder %s11, 2
      // Predicated region
      $region13: #{tpu_custom_call.1} parent=5 // pred_check
        %p119 = pneg %p118
      $region14: #{tpu_custom_call.1} parent=5 // pred_check_branch
        %121 = sbr.rel (%p119) target = $region16
      $region15: #{tpu_custom_call.1} parent=5 // pred_region
        // Predicated region
        $region17: #{tpu_custom_call.1} parent=15 // pred_check
          %p122 = pneg %p43
        $region18: #{tpu_custom_call.1} parent=15 // pred_check_branch
          %124 = sbr.rel (%p122) target = $region20
        $region19: #{tpu_custom_call.1} parent=15 // pred_region
          %p125 = scmp.lt.s32.totalorder %s18, 1
          %s126 = scalar_select %p125, %s18, 1
          %s127 = smul.addr %s126, 2
          %s128 = smul.addr %s127, 4
          %s129 = scalar_lea.vmem %s0, %s128
        $region20: #{tpu_custom_call.1} parent=15 // pred_fallthru
          _
        // Predicated region
        $region21: #{tpu_custom_call.1} parent=15 // pred_check
          %p130 = pneg %p71
        $region22: #{tpu_custom_call.1} parent=15 // pred_check_branch
          %132 = sbr.rel (%p130) target = $region24
        $region23: #{tpu_custom_call.1} parent=15 // pred_region
          %s133 = smul.u32 2, %s19
          %p134 = scmp.lt.s32.totalorder %s18, 1
          %s135 = scalar_select %p134, %s18, 1
          %p136 = scmp.lt.s32.totalorder %s133, 1
          %s137 = scalar_select %p136, %s133, 1
          %s138 = smul.addr %s135, 2
          %s139 = sadd.s32 %s137, %s138
          %s140 = smul.addr %s139, 4
          %s141 = scalar_lea.vmem %s1, %s140
          %s142 = smul.u32 2, %s19
        $region24: #{tpu_custom_call.1} parent=15 // pred_fallthru
          _
      $region16: #{tpu_custom_call.1} parent=5 // pred_fallthru
        _
      %p143 = scmp.le.s32.totalorder 1, %s11
      %p144 = scmp.lt.s32.totalorder %s11, 3
      %p145 = pnand %p143, %p144
      %p146 = pneg %p145
      // Predicated region
      $region25: #{tpu_custom_call.1} parent=5 // pred_check
        _
      $region26: #{tpu_custom_call.1} parent=5 // pred_check_branch
        %148 = sbr.rel (%p145) target = $region28
      $region27: #{tpu_custom_call.1} parent=5 // pred_region
        %s149 = ssub.s32 %s11, 1
        %p150 = scmp.lt.s32.totalorder %s20, 1
        %s151 = scalar_select %p150, %s20, 1
        %s152 = smul.addr %s151, 2
        %s153 = smul.addr %s152, 4
        %s154 = scalar_lea.vmem %s0, %s153
        %p155 = pneg %p49
        %p156 = pneg %p46
        %s157 = smul.u32 2, %s21
        %p158 = scmp.lt.s32.totalorder %s20, 1
        %s159 = scalar_select %p158, %s20, 1
        %p160 = scmp.lt.s32.totalorder %s157, 1
        %s161 = scalar_select %p160, %s157, 1
        %s162 = smul.addr %s159, 2
        %s163 = sadd.s32 %s161, %s162
        %s164 = smul.addr %s163, 4
        %s165 = scalar_lea.vmem %s1, %s164
        %p166 = pneg %p77
        %p167 = pneg %p74
        %p168 = pneg %p103
        %p169 = pneg %p100
        %s170 = sand.u32 %s90, 1
        %s171 = scalar_lea.sflag [#allocation4], %s170
        %s172 = sand.u32 %s90, 1
        %s173 = smul.addr %s172, 16
        %s174 = scalar_lea.vmem [#allocation3], %s173
        %p175 = scmp.lt.s32.totalorder %s20, 1
        %s176 = scalar_select %p175, %s20, 1
        %s177 = smul.addr %s176, 2
        %s178 = smul.addr %s177, 4
        %s179 = scalar_lea.vmem %s0, %s178
        %s180 = smul.u32 2, %s21
        %p181 = scmp.lt.s32.totalorder %s20, 1
        %s182 = scalar_select %p181, %s20, 1
        %p183 = scmp.lt.s32.totalorder %s180, 1
        %s184 = scalar_select %p183, %s180, 1
        %s185 = smul.addr %s182, 2
        %s186 = sadd.s32 %s184, %s185
        %s187 = smul.addr %s186, 4
        %s188 = scalar_lea.vmem %s1, %s187
        %s189 = smul.u32 2, %s21
        %p191 = scmp.eq.s32.totalorder %s21, 0
        // Predicated region
        $region29: #{tpu_custom_call.1} parent=27 // pred_check
          %p192 = pneg %p191
        $region30: #{tpu_custom_call.1} parent=27 // pred_check_branch
          %194 = sbr.rel (%p192) target = $region32
        $region31: #{tpu_custom_call.1} parent=27 // pred_region
          %vm195 = vcmask 27648
          %196 = vst.msk [vmem:[#allocation2] sm:$0xf] %vm195, 0.0
        $region32: #{tpu_custom_call.1} parent=27 // pred_fallthru
          _
        %v197 = vld [vmem:[%s188] sm:$0xff]
        %v199 = vcombine.high %v197, %v197
        %v201 = vpack.c.bf16 %v197, %v197
        %v202 = vpack.c.bf16 %v199, %v199
        %v203 = vld [vmem:[#allocation2] sm:$0xf]
        %204 = vmatprep.subr.bf16.mxu0 %v202
        %205 = vmatpush1.bf16.xpose.msra.mxu0 %v201
        %206 = vmatprep.subr.bf16.mxu0 0
        %207 = vmatpush1.bf16.xpose.msra.mxu0 0
        %208 = vmatprep.subr.bf16.mxu0 0
        %209 = vmatpush1.bf16.xpose.msra.mxu0 0
        %210 = vmatprep.subr.bf16.mxu0 0
        %211 = vmatpush1.bf16.xpose.msra.mxu0 0
        %212 = vmatprep.subr.bf16.mxu0 0
        %213 = vmatpush1.bf16.xpose.msra.mxu0 0
        %214 = vmatprep.subr.bf16.mxu0 0
        %215 = vmatpush1.bf16.xpose.msra.mxu0 0
        %216 = vmatprep.subr.bf16.mxu0 0
        %217 = vmatpush1.bf16.xpose.msra.mxu0 0
        %218 = vmatprep.subr.bf16.mxu0 0
        %219 = vmatpush1.bf16.xpose.msra.mxu0 0
        %220 = vmatprep.subr.bf16.mxu0 0
        %221 = vmatpush1.bf16.xpose.msra.mxu0 0
        %222 = vmatprep.subr.bf16.mxu0 0
        %223 = vmatpush1.bf16.xpose.msra.mxu0 0
        %224 = vmatprep.subr.bf16.mxu0 0
        %225 = vmatpush1.bf16.xpose.msra.mxu0 0
        %226 = vmatprep.subr.bf16.mxu0 0
        %227 = vmatpush1.bf16.xpose.msra.mxu0 0
        %228 = vmatprep.subr.bf16.mxu0 0
        %229 = vmatpush1.bf16.xpose.msra.mxu0 0
        %230 = vmatprep.subr.bf16.mxu0 0
        %231 = vmatpush1.bf16.xpose.msra.mxu0 0
        %232 = vmatprep.subr.bf16.mxu0 0
        %233 = vmatpush1.bf16.xpose.msra.mxu0 0
        %234 = vmatprep.subr.bf16.mxu0 0
        %235 = vmatpush1.bf16.xpose.msra.mxu0 0
        %236 = vmatprep.mubr.bf16.mxu0 %v202
        %237 = vmatmul.mubr.bf16.gmra.mrb[0].mxu0 %v201
        %v238 = vpop.f32.mrb[0].mxu0
        %v239 = vadd.f32 0.0, %v238
        %v240 = vpop.f32.mrb[0].mxu0
        %v241 = vpop.f32.mrb[0].mxu0
        %v242 = vpop.f32.mrb[0].mxu0
        %243 = vdwg.mxu0
        %v244 = vadd.f32 %v203, %v239
        %vm245 = vcmask 27648
        %246 = vst.msk [vmem:[#allocation2] sm:$0xf] %vm245, %v244
        // Predicated region
        $region33: #{tpu_custom_call.1} parent=27 // pred_check
          %p247 = pneg %p191
        $region34: #{tpu_custom_call.1} parent=27 // pred_check_branch
          %249 = sbr.rel (%p247) target = $region36
        $region35: #{tpu_custom_call.1} parent=27 // pred_region
          %v250 = vld [vmem:[%s179] sm:$0xf]
          %v251 = vld [vmem:[%s179 + $0x4] sm:$0xf]
          %v252 = vld [vmem:[#allocation2] sm:$0xf]
          %v253 = vpack.c.bf16 %v252, %v252
          %v256 = vunpack.c.l.b16 %v250
          %v257 = vunpack.c.l.b16 %v251
          %v258 = vpack.c.b16 %v257, %v256
          %vm259 = vcmask 31744
          %v261 = vsel %vm259, %v258, 0
          %vm263 = vcmask 1041408
          %v265 = vsel %vm263, %v253, 0
          %267 = vmatprep.subr.bf16.mxu0 0
          %268 = vmatpush1.bf16.msra.mxu0 %v265
          %269 = vmatprep.subr.bf16.mxu0 0
          %270 = vmatpush1.bf16.msra.mxu0 0
          %271 = vmatprep.subr.bf16.mxu0 0
          %272 = vmatpush1.bf16.msra.mxu0 0
          %273 = vmatprep.subr.bf16.mxu0 0
          %274 = vmatpush1.bf16.msra.mxu0 0
          %275 = vmatprep.subr.bf16.mxu0 0
          %276 = vmatpush1.bf16.msra.mxu0 0
          %277 = vmatprep.subr.bf16.mxu0 0
          %278 = vmatpush1.bf16.msra.mxu0 0
          %279 = vmatprep.subr.bf16.mxu0 0
          %280 = vmatpush1.bf16.msra.mxu0 0
          %281 = vmatprep.subr.bf16.mxu0 0
          %282 = vmatpush1.bf16.msra.mxu0 0
          %283 = vmatprep.subr.bf16.mxu0 0
          %284 = vmatpush1.bf16.msra.mxu0 0
          %285 = vmatprep.subr.bf16.mxu0 0
          %286 = vmatpush1.bf16.msra.mxu0 0
          %287 = vmatprep.subr.bf16.mxu0 0
          %288 = vmatpush1.bf16.msra.mxu0 0
          %289 = vmatprep.subr.bf16.mxu0 0
          %290 = vmatpush1.bf16.msra.mxu0 0
          %291 = vmatprep.subr.bf16.mxu0 0
          %292 = vmatpush1.bf16.msra.mxu0 0
          %293 = vmatprep.subr.bf16.mxu0 0
          %294 = vmatpush1.bf16.msra.mxu0 0
          %295 = vmatprep.subr.bf16.mxu0 0
          %296 = vmatpush1.bf16.msra.mxu0 0
          %297 = vmatprep.subr.bf16.mxu0 0
          %298 = vmatpush1.bf16.msra.mxu0 0
          %299 = vmatprep.mubr.bf16.mxu0 0
          %300 = vmatmul.mubr.bf16.gmra.mrb[0].mxu0 %v261
          %v301 = vpop.f32.mrb[0].mxu0
          %v302 = vadd.f32 0.0, %v301
          %v303 = vpop.f32.mrb[0].mxu0
          %v304 = vpop.f32.mrb[0].mxu0
          %v305 = vadd.f32 0.0, %v304
          %v306 = vpop.f32.mrb[0].mxu0
          %307 = vdwg.mxu0
          %v308 = vpack.c.bf16 %v305, %v302
          %v310 = vsel %vm259, %v308, 0
          %312 = vmatprep.subr.bf16.mxu0 0
          %313 = vmatpush1.bf16.xpose.msra.mxu0 %v261
          %314 = vmatprep.subr.bf16.mxu0 0
          %315 = vmatpush1.bf16.xpose.msra.mxu0 0
          %316 = vmatprep.subr.bf16.mxu0 0
          %317 = vmatpush1.bf16.xpose.msra.mxu0 0
          %318 = vmatprep.subr.bf16.mxu0 0
          %319 = vmatpush1.bf16.xpose.msra.mxu0 0
          %320 = vmatprep.subr.bf16.mxu0 0
          %321 = vmatpush1.bf16.xpose.msra.mxu0 0
          %322 = vmatprep.subr.bf16.mxu0 0
          %323 = vmatpush1.bf16.xpose.msra.mxu0 0
          %324 = vmatprep.subr.bf16.mxu0 0
          %325 = vmatpush1.bf16.xpose.msra.mxu0 0
          %326 = vmatprep.subr.bf16.mxu0 0
          %327 = vmatpush1.bf16.xpose.msra.mxu0 0
          %328 = vmatprep.subr.bf16.mxu0 0
          %329 = vmatpush1.bf16.xpose.msra.mxu0 0
          %330 = vmatprep.subr.bf16.mxu0 0
          %331 = vmatpush1.bf16.xpose.msra.mxu0 0
          %332 = vmatprep.subr.bf16.mxu0 0
          %333 = vmatpush1.bf16.xpose.msra.mxu0 0
          %334 = vmatprep.subr.bf16.mxu0 0
          %335 = vmatpush1.bf16.xpose.msra.mxu0 0
          %336 = vmatprep.subr.bf16.mxu0 0
          %337 = vmatpush1.bf16.xpose.msra.mxu0 0
          %338 = vmatprep.subr.bf16.mxu0 0
          %339 = vmatpush1.bf16.xpose.msra.mxu0 0
          %340 = vmatprep.subr.bf16.mxu0 0
          %341 = vmatpush1.bf16.xpose.msra.mxu0 0
          %342 = vmatprep.subr.bf16.mxu0 0
          %343 = vmatpush1.bf16.xpose.msra.mxu0 0
          %344 = vmatprep.mubr.bf16.mxu0 0
          %345 = vmatmul.mubr.bf16.gmra.mrb[0].mxu0 %v310
          %v346 = vpop.f32.mrb[0].mxu0
          %v347 = vadd.f32 0.0, %v346
          %v348 = vpop.f32.mrb[0].mxu0
          %v349 = vpop.f32.mrb[0].mxu0
          %v350 = vadd.f32 0.0, %v349
          %v351 = vpop.f32.mrb[0].mxu0
          %352 = vdwg.mxu0
          %v353 = vmul.f32 %v347, 0.00048828125
          %v354 = vmul.f32 %v350, 0.00048828125
          %vm355 = vcmask 130048
          %356 = vst.msk [vmem:[%s174] sm:$0xff] %vm355, %v353
          %357 = vst.msk [vmem:[%s174 + $0x8] sm:$0xff] %vm355, %v354
        $region36: #{tpu_custom_call.1} parent=27 // pred_fallthru
          _
        %s358 = sand.u32 %s90, 1
        %s359 = scalar_lea.sflag [#allocation4], %s358
        %s360 = sand.u32 %s90, 1
        %s361 = smul.addr %s360, 16
        %s362 = scalar_lea.vmem [#allocation3], %s361
        // Predicated region
        $region37: #{tpu_custom_call.1} parent=27 // pred_check
          %p363 = pneg %p100
        $region38: #{tpu_custom_call.1} parent=27 // pred_check_branch
          %365 = sbr.rel (%p363) target = $region40
        $region39: #{tpu_custom_call.1} parent=27 // pred_region
          %s367 = ssub.s32 256, 256
          %368 = vsyncadd %s359, %s367
          %s369 = smul.addr %s20, 2
          %s370 = smul.addr %s369, 128
          %s371 = scalar_lea.hbm %s2, %s370
          %s372 = sshll.u32 %s362, 4
          %s373 = int_to_ptr.vmem [resolvable:$true] %s372
          %378 = dma.vmem_to_hbm [thread:$0]  %s373, 256, %s371, %s359, 128, 128, 8
        $region40: #{tpu_custom_call.1} parent=27 // pred_fallthru
          _
      $region28: #{tpu_custom_call.1} parent=5 // pred_fallthru
        _
      %p379 = scmp.le.s32.totalorder 2, %s11
      // Predicated region
      $region41: #{tpu_custom_call.1} parent=5 // pred_check
        %p380 = pneg %p379
      $region42: #{tpu_custom_call.1} parent=5 // pred_check_branch
        %382 = sbr.rel (%p380) target = $region44
      $region43: #{tpu_custom_call.1} parent=5 // pred_region
        %s383 = ssub.s32 %s11, 2
        // Predicated region
        $region45: #{tpu_custom_call.1} parent=43 // pred_check
          %p384 = pneg %p106
        $region46: #{tpu_custom_call.1} parent=43 // pred_check_branch
          %386 = sbr.rel (%p384) target = $region48
        $region47: #{tpu_custom_call.1} parent=43 // pred_region
          %s387 = sand.u32 %s91, 1
          %s388 = scalar_lea.sflag [#allocation4], %s387
          %s389 = sand.u32 %s91, 1
          %s390 = smul.addr %s389, 16
          %s391 = scalar_lea.vmem [#allocation3], %s390
          %392 = dma.done %s388, 256
        $region48: #{tpu_custom_call.1} parent=43 // pred_fallthru
          _
      $region44: #{tpu_custom_call.1} parent=5 // pred_fallthru
        _
    $region6: #{tpu_custom_call.1} parent=1 // loop_footer
      %s15 = sadd.s32 1, %s11
    $region7: #{tpu_custom_call.1} parent=1 // loop_footer_branch
      %10 = sbr.rel target = $region3
    $region8: #{tpu_custom_call.1} parent=1 // loop_exit
      _
    %393 = vsyncpa [#allocation4], 1
    %s394 = scalar_lea.sflag [#allocation4], 1
    %395 = vsyncpa %s394, 1

</llo_original>
